<compile_context>
chip_gen: v7x
topology: tpu7x:2x2x1
jax: 0.10.0
libtpu: 0.0.40
codegen_flags: <defaults>
</compile_context>

<pallas_src>
import jax
import jax.numpy as jnp
import numpy as np
from jax.experimental import pallas as pl
from jax.experimental.pallas import tpu as pltpu


def _round_up(x, m):
    return (x + m - 1) // m * m


# --------------------------------------------------------------------------
# Kernel (batch on the lane axis; one batch tile of TB rows per grid step)
# --------------------------------------------------------------------------
def ntn_match_kernel(uid_ref, qid_ref, embT_ref, wbigT_ref, tilematT_ref,
                     onescol_ref, addcol_ref, selT_ref, ucol_ref, out_ref):
    """RawNTN scores for one batch tile, fully transposed (batch on lanes).

    uid_ref/qid_ref : (1, TB) int32   anchor / query token ids
    embT            : (L, Vpad)       embedding table, transposed (resident)
    wbigT           : (P, R)          packed bilinear slices + Vt_bot
    tilematT        : (P, L)          replicates e1 into every slice
    onescol         : (P, 1)          ones over linear-term rows
    addcol          : (P, 1)          Vt_top (scattered) + bilinear bias
    selT            : (KP, P)         per-slice reduction matrix
    ucol            : (KP, 1)         u_R
    out_ref         : (1, TB) f32     scores, lane b = batch row b of the tile
    """
    embT = embT_ref[...]                                   # (L, Vpad)
    cdt = embT.dtype
    vpad = embT.shape[1]
    tb = uid_ref.shape[1]

    # Fused embedding gather: one-hot matmul against the resident table.
    viota = jax.lax.broadcasted_iota(jnp.int32, (vpad, tb), 0)
    oh_u = (viota == uid_ref[...]).astype(cdt)             # (Vpad, TB)
    oh_q = (viota == qid_ref[...]).astype(cdt)
    e1T = jnp.dot(embT, oh_u, preferred_element_type=jnp.float32).astype(cdt)
    e2T = jnp.dot(embT, oh_q, preferred_element_type=jnp.float32).astype(cdt)

    # All K bilinear slices + the e2-side linear term in one wide MXU matmul.
    tT = jnp.dot(wbigT_ref[...], e2T,
                 preferred_element_type=jnp.float32)       # (P, TB)

    # Replicate e1 into every slice via a 0/1 matmul; ones over linear rows.
    e1fac = jnp.dot(tilematT_ref[...], e1T,
                    preferred_element_type=jnp.float32) + onescol_ref[...]

    # addcol folds the e1-side linear term (Vt_top) and the bilinear bias.
    prod = e1fac * (tT + addcol_ref[...])                  # (P, TB)

    # Per-slice reduction -> z[k, b] = bil + V[e1;e2] + bias.
    z = jnp.dot(selT_ref[...], prod,
                preferred_element_type=jnp.float32)        # (KP, TB)
    act = jnp.tanh(z)

    # u_R projection as a sublane reduction -> lane-dense (1, TB) scores.
    out_ref[...] = jnp.sum(act * ucol_ref[...], axis=0, keepdims=True)


# --------------------------------------------------------------------------
# Host-side weight packing (pure numpy; call ONCE per parameter set)
# --------------------------------------------------------------------------
def pack_ntn_weights(embedding, W, Wb, Vt, u, *, compute_dtype=jnp.float32):
    """Pack embedding + RawNTN parameters into lane-aligned kernel operands.

    embedding: (V, in_dim)   W: (K, L, R)   Wb: (1, K)   Vt: (L+R, K)   u: (K, 1)
    """
    embedding = np.asarray(embedding, np.float32)
    W = np.asarray(W, np.float32)
    Wb = np.asarray(Wb, np.float32)
    Vt = np.asarray(Vt, np.float32)
    u = np.asarray(u, np.float32)

    V, in_dim = embedding.shape
    K, L, R = W.shape
    assert L == in_dim and R == in_dim, "mode='r' => l_dim == r_dim == in_dim"
    KL = K * L
    P = _round_up(KL + K, 128)
    KP = _round_up(K, 8)
    Vpad = _round_up(V, 8)

    embT = np.zeros((L, Vpad), np.float32)
    embT[:, :V] = embedding.T

    wbigT = np.zeros((P, R), np.float32)
    wbigT[:KL, :] = W.reshape(KL, R)              # row k*L+i = W[k, i, :]
    wbigT[KL:KL + K, :] = Vt[L:, :].T             # row KL+k, col j = Vt[L+j, k]

    tilematT = np.zeros((P, L), np.float32)
    tilematT[:KL, :] = np.tile(np.eye(L, dtype=np.float32), (K, 1))

    onescol = np.zeros((P, 1), np.float32)
    onescol[KL:KL + K, 0] = 1.0

    addcol = np.zeros((P, 1), np.float32)
    addcol[:KL, 0] = Vt[:L, :].T.reshape(KL)      # addcol[k*L+i] = Vt[i, k]
    addcol[KL:KL + K, 0] = Wb.reshape(K)

    selT = np.zeros((KP, P), np.float32)
    rows = np.arange(KL)
    selT[rows // L, rows] = 1.0
    selT[np.arange(K), KL + np.arange(K)] = 1.0

    ucol = np.zeros((KP, 1), np.float32)
    ucol[:K, 0] = u.reshape(K)

    cdt = jnp.dtype(compute_dtype)
    return dict(
        embT=jnp.asarray(embT, cdt),
        wbigT=jnp.asarray(wbigT, cdt),
        tilematT=jnp.asarray(tilematT, cdt),
        onescol=jnp.asarray(onescol),     # kept f32 (added to f32 accumulators)
        addcol=jnp.asarray(addcol),
        selT=jnp.asarray(selT),
        ucol=jnp.asarray(ucol),
    )


# --------------------------------------------------------------------------
# pallas_call wrapper
# --------------------------------------------------------------------------
def _choose_tb(batch, tb):
    b128 = _round_up(max(batch, 1), 128)
    tb = _round_up(max(tb, 128), 128)
    tb = min(tb, b128)
    # keep the grid >= 2 whenever the batch allows, so v7x megacore engages
    if b128 >= 256:
        tb = min(tb, _round_up(b128 // 2, 128))
    return tb


def ntn_match_from_ids(u_ids, q_ids, packed, *, tb=2048):
    """scores[b] = RawNTN(embedding[u_ids[b]], embedding[q_ids[b]])."""
    B = u_ids.shape[0]
    tb = _choose_tb(B, tb)
    b_pad = _round_up(B, tb)

    uid = jnp.zeros((1, b_pad), jnp.int32).at[0, :B].set(u_ids.astype(jnp.int32))
    qid = jnp.zeros((1, b_pad), jnp.int32).at[0, :B].set(q_ids.astype(jnp.int32))

    grid = (b_pad // tb,)

    def id_spec():
        return pl.BlockSpec((1, tb), lambda i: (0, i))

    def const_spec(a):
        # Full-array block + constant index_map -> stays resident in VMEM.
        return pl.BlockSpec(a.shape, lambda i: (0, 0))

    out = pl.pallas_call(
        ntn_match_kernel,
        out_shape=jax.ShapeDtypeStruct((1, b_pad), jnp.float32),
        grid=grid,
        in_specs=[id_spec(), id_spec(),
                  const_spec(packed["embT"]), const_spec(packed["wbigT"]),
                  const_spec(packed["tilematT"]), const_spec(packed["onescol"]),
                  const_spec(packed["addcol"]), const_spec(packed["selT"]),
                  const_spec(packed["ucol"])],
        out_specs=pl.BlockSpec((1, tb), lambda i: (0, i)),
        compiler_params=pltpu.CompilerParams(
            dimension_semantics=("parallel",),
            vmem_limit_bytes=32 * 1024 * 1024),
    )(uid, qid, packed["embT"], packed["wbigT"], packed["tilematT"],
      packed["onescol"], packed["addcol"], packed["selT"], packed["ucol"])

    return out[0, :B][:, None]


def expan_match_forward(q_ids, u_ids, packed, *, tb=2048):
    """ExpanMatchModel.forward for mode='r', matching_method='NTN'.

    q_ids : (B,) int32 query token ids      u_ids : (B,) int32 anchor ids
    packed: result of pack_ntn_weights(...) (pack once, reuse every call)
    """
    # forward(): ur = embedding(us); qf = embedding(q); scores = match(ur, qf)
    return ntn_match_from_ids(u_ids, q_ids, packed, tb=tb)


# --------------------------------------------------------------------------
# Pure-JAX reference
# --------------------------------------------------------------------------
def ntn_reference(e1, e2, W, Wb, Vt, u):
    bil = jnp.einsum("bl,klr,br->bk", e1, W, e2)
    lin = jnp.concatenate([e1, e2], axis=-1) @ Vt
    return jnp.tanh(bil + Wb + lin) @ u


if __name__ == "__main__":
    B = 2          # batch
    vocab = 20     # embedding vocab size
    in_dim = 32    # r_dim == in_dim; mode='r' -> l_dim == in_dim
    K = 5          # NTN slices (options['k'])

    key = jax.random.PRNGKey(0)
    k_emb, k_w, k_wb, k_v, k_u, k_q, k_us = jax.random.split(key, 7)

    embedding = jax.random.normal(k_emb, (vocab, in_dim), jnp.float32) * 0.1
    W = jax.random.normal(k_w, (K, in_dim, in_dim), jnp.float32) * 0.05
    Wb = jax.random.normal(k_wb, (1, K), jnp.float32) * 0.05
    Vt = jax.random.normal(k_v, (2 * in_dim, K), jnp.float32) * 0.05
    u = jax.random.normal(k_u, (K, 1), jnp.float32) * 0.1

    q_ids = jax.random.randint(k_q, (B,), 0, vocab, dtype=jnp.int32)
    u_ids = jax.random.randint(k_us, (B,), 0, vocab, dtype=jnp.int32)

    # Pack once (host numpy), reuse across forwards.
    packed_f32 = pack_ntn_weights(embedding, W, Wb, Vt, u)

    scores = jax.block_until_ready(expan_match_forward(q_ids, u_ids, packed_f32))

    # Correctness check against a pure-JAX reference (f32 path).
    qf = jnp.take(embedding, q_ids, axis=0)
    ur = jnp.take(embedding, u_ids, axis=0)
    ref = ntn_reference(ur, qf, W, Wb, Vt, u)
    assert scores.shape == (B, 1)
    assert np.allclose(np.asarray(scores), np.asarray(ref), atol=1e-5), (scores, ref)

    # Multi-tile (grid >= 2) path — exercises batch tiling / padding.
    B2 = 384
    k_q2, k_u2 = jax.random.split(jax.random.PRNGKey(1), 2)
    q2 = jax.random.randint(k_q2, (B2,), 0, vocab, dtype=jnp.int32)
    u2 = jax.random.randint(k_u2, (B2,), 0, vocab, dtype=jnp.int32)
    s2 = jax.block_until_ready(expan_match_forward(q2, u2, packed_f32))
    ref2 = ntn_reference(jnp.take(embedding, u2, axis=0),
                         jnp.take(embedding, q2, axis=0), W, Wb, Vt, u)
    assert np.allclose(np.asarray(s2), np.asarray(ref2), atol=1e-5)

    # Optional bfloat16 compute path (halves resident-weight footprint /
    # doubles MXU rate); looser tolerance as reviewed.
    packed_bf16 = pack_ntn_weights(embedding, W, Wb, Vt, u,
                                   compute_dtype=jnp.bfloat16)
    s3 = jax.block_until_ready(expan_match_forward(q2, u2, packed_bf16))
    assert np.allclose(np.asarray(s3), np.asarray(ref2), atol=2e-2)

    print("KERNEL_OK")
</pallas_src>

<mosaic_0001>
module attributes {stable_mosaic.version = 11 : i64} {
  func.func @ntn_match_kernel(%arg0: i32, %arg1: memref<1x128xi32, #tpu.memory_space<vmem>>, %arg2: memref<1x128xi32, #tpu.memory_space<vmem>>, %arg3: memref<32x24xf32, #tpu.memory_space<vmem>>, %arg4: memref<256x32xf32, #tpu.memory_space<vmem>>, %arg5: memref<256x32xf32, #tpu.memory_space<vmem>>, %arg6: memref<256x1xf32, #tpu.memory_space<vmem>>, %arg7: memref<256x1xf32, #tpu.memory_space<vmem>>, %arg8: memref<8x256xf32, #tpu.memory_space<vmem>>, %arg9: memref<8x1xf32, #tpu.memory_space<vmem>>, %arg10: memref<1x128xf32, #tpu.memory_space<vmem>>) attributes {dimension_semantics = [#tpu.dimension_semantics<parallel>], iteration_bounds = array<i64: 1>, scalar_prefetch = 0 : i64, scratch_operands = 0 : i64, tpu.core_type = #tpu.core_type<tc>, window_params = [{transform_indices = @transform_0, window_bounds = array<i64: 1, 128>}, {transform_indices = @transform_1, window_bounds = array<i64: 1, 128>}, {pipeline_mode = #tpu.pipeline_mode<synchronous>, transform_indices = @transform_2, window_bounds = array<i64: 32, 24>}, {pipeline_mode = #tpu.pipeline_mode<synchronous>, transform_indices = @transform_3, window_bounds = array<i64: 256, 32>}, {pipeline_mode = #tpu.pipeline_mode<synchronous>, transform_indices = @transform_4, window_bounds = array<i64: 256, 32>}, {pipeline_mode = #tpu.pipeline_mode<synchronous>, transform_indices = @transform_5, window_bounds = array<i64: 256, 1>}, {pipeline_mode = #tpu.pipeline_mode<synchronous>, transform_indices = @transform_6, window_bounds = array<i64: 256, 1>}, {pipeline_mode = #tpu.pipeline_mode<synchronous>, transform_indices = @transform_7, window_bounds = array<i64: 8, 256>}, {pipeline_mode = #tpu.pipeline_mode<synchronous>, transform_indices = @transform_8, window_bounds = array<i64: 8, 1>}, {transform_indices = @transform_9, window_bounds = array<i64: 1, 128>}]} {
    %c0 = arith.constant 0 : index
    %c0_0 = arith.constant 0 : index
    %0 = vector.load %arg3[%c0, %c0_0] : memref<32x24xf32, #tpu.memory_space<vmem>>, vector<32x24xf32>
    %1 = tpu.iota {dimensions = array<i32: 0>} : vector<24x128xi32>
    %c0_1 = arith.constant 0 : index
    %c0_2 = arith.constant 0 : index
    %2 = vector.load %arg1[%c0_1, %c0_2] : memref<1x128xi32, #tpu.memory_space<vmem>>, vector<1x128xi32>
    %3 = vector.broadcast %2 : vector<1x128xi32> to vector<24x128xi32>
    %4 = arith.cmpi eq, %1, %3 : vector<24x128xi32>
    %5 = arith.extui %4 : vector<24x128xi1> to vector<24x128xi32>
    %6 = arith.sitofp %5 : vector<24x128xi32> to vector<24x128xf32>
    %c0_3 = arith.constant 0 : index
    %c0_4 = arith.constant 0 : index
    %7 = vector.load %arg2[%c0_3, %c0_4] : memref<1x128xi32, #tpu.memory_space<vmem>>, vector<1x128xi32>
    %8 = vector.broadcast %7 : vector<1x128xi32> to vector<24x128xi32>
    %9 = arith.cmpi eq, %1, %8 : vector<24x128xi32>
    %10 = arith.extui %9 : vector<24x128xi1> to vector<24x128xi32>
    %11 = arith.sitofp %10 : vector<24x128xi32> to vector<24x128xf32>
    %cst = arith.constant dense<0.000000e+00> : vector<32x128xf32>
    %12 = tpu.matmul %0, %6, %cst {dimension_numbers = #tpu.dot_dimension_numbers<[1], [0], [0], [1], [0, 0, 1, 1], [], []>} : vector<32x24xf32>, vector<24x128xf32>, vector<32x128xf32> -> vector<32x128xf32>
    %cst_5 = arith.constant dense<0.000000e+00> : vector<32x128xf32>
    %13 = tpu.matmul %0, %11, %cst_5 {dimension_numbers = #tpu.dot_dimension_numbers<[1], [0], [0], [1], [0, 0, 1, 1], [], []>} : vector<32x24xf32>, vector<24x128xf32>, vector<32x128xf32> -> vector<32x128xf32>
    %c0_6 = arith.constant 0 : index
    %c0_7 = arith.constant 0 : index
    %14 = vector.load %arg4[%c0_6, %c0_7] : memref<256x32xf32, #tpu.memory_space<vmem>>, vector<256x32xf32>
    %cst_8 = arith.constant dense<0.000000e+00> : vector<256x128xf32>
    %15 = tpu.matmul %14, %13, %cst_8 {dimension_numbers = #tpu.dot_dimension_numbers<[1], [0], [0], [1], [0, 0, 1, 1], [], []>} : vector<256x32xf32>, vector<32x128xf32>, vector<256x128xf32> -> vector<256x128xf32>
    %c0_9 = arith.constant 0 : index
    %c0_10 = arith.constant 0 : index
    %16 = vector.load %arg5[%c0_9, %c0_10] : memref<256x32xf32, #tpu.memory_space<vmem>>, vector<256x32xf32>
    %cst_11 = arith.constant dense<0.000000e+00> : vector<256x128xf32>
    %17 = tpu.matmul %16, %12, %cst_11 {dimension_numbers = #tpu.dot_dimension_numbers<[1], [0], [0], [1], [0, 0, 1, 1], [], []>} : vector<256x32xf32>, vector<32x128xf32>, vector<256x128xf32> -> vector<256x128xf32>
    %c0_12 = arith.constant 0 : index
    %c0_13 = arith.constant 0 : index
    %18 = vector.load %arg6[%c0_12, %c0_13] : memref<256x1xf32, #tpu.memory_space<vmem>>, vector<256x1xf32>
    %19 = vector.broadcast %18 : vector<256x1xf32> to vector<256x128xf32>
    %20 = arith.addf %17, %19 : vector<256x128xf32>
    %c0_14 = arith.constant 0 : index
    %c0_15 = arith.constant 0 : index
    %21 = vector.load %arg7[%c0_14, %c0_15] : memref<256x1xf32, #tpu.memory_space<vmem>>, vector<256x1xf32>
    %22 = vector.broadcast %21 : vector<256x1xf32> to vector<256x128xf32>
    %23 = arith.addf %15, %22 : vector<256x128xf32>
    %24 = arith.mulf %20, %23 : vector<256x128xf32>
    %c0_16 = arith.constant 0 : index
    %c0_17 = arith.constant 0 : index
    %25 = vector.load %arg8[%c0_16, %c0_17] : memref<8x256xf32, #tpu.memory_space<vmem>>, vector<8x256xf32>
    %cst_18 = arith.constant dense<0.000000e+00> : vector<8x128xf32>
    %26 = tpu.matmul %25, %24, %cst_18 {dimension_numbers = #tpu.dot_dimension_numbers<[1], [0], [0], [1], [0, 0, 1, 1], [], []>} : vector<8x256xf32>, vector<256x128xf32>, vector<8x128xf32> -> vector<8x128xf32>
    %27 = math.tanh %26 : vector<8x128xf32>
    %c0_19 = arith.constant 0 : index
    %c0_20 = arith.constant 0 : index
    %28 = vector.load %arg9[%c0_19, %c0_20] : memref<8x1xf32, #tpu.memory_space<vmem>>, vector<8x1xf32>
    %29 = vector.broadcast %28 : vector<8x1xf32> to vector<8x128xf32>
    %30 = arith.mulf %27, %29 : vector<8x128xf32>
    %cst_21 = arith.constant dense<0.000000e+00> : vector<128xf32>
    %31 = vector.multi_reduction <add>, %30, %cst_21 [0] : vector<8x128xf32> to vector<128xf32>
    %32 = vector.shape_cast %31 : vector<128xf32> to vector<1x128xf32>
    %c0_22 = arith.constant 0 : index
    %c0_23 = arith.constant 0 : index
    %33 = vector.load %arg10[%c0_22, %c0_23] : memref<1x128xf32, #tpu.memory_space<vmem>>, vector<1x128xf32>
    tpu.vector_store %arg10[%c0_22, %c0_23], %32 {strides = array<i32>} : memref<1x128xf32, #tpu.memory_space<vmem>>, vector<1x128xf32>,
    return
  }
  func.func @transform_0(%arg0: i32) -> (i32, i32) {
    %c0_i32 = arith.constant 0 : i32
    %c0_i32_0 = arith.constant 0 : i32
    return %c0_i32, %arg0 : i32, i32
  }
  func.func @transform_1(%arg0: i32) -> (i32, i32) {
    %c0_i32 = arith.constant 0 : i32
    %c0_i32_0 = arith.constant 0 : i32
    return %c0_i32, %arg0 : i32, i32
  }
  func.func @transform_2(%arg0: i32) -> (i32, i32) {
    %c0_i32 = arith.constant 0 : i32
    %c0_i32_0 = arith.constant 0 : i32
    %c0_i32_1 = arith.constant 0 : i32
    return %c0_i32, %c0_i32_0 : i32, i32
  }
  func.func @transform_3(%arg0: i32) -> (i32, i32) {
    %c0_i32 = arith.constant 0 : i32
    %c0_i32_0 = arith.constant 0 : i32
    %c0_i32_1 = arith.constant 0 : i32
    return %c0_i32, %c0_i32_0 : i32, i32
  }
  func.func @transform_4(%arg0: i32) -> (i32, i32) {
    %c0_i32 = arith.constant 0 : i32
    %c0_i32_0 = arith.constant 0 : i32
    %c0_i32_1 = arith.constant 0 : i32
    return %c0_i32, %c0_i32_0 : i32, i32
  }
  func.func @transform_5(%arg0: i32) -> (i32, i32) {
    %c0_i32 = arith.constant 0 : i32
    %c0_i32_0 = arith.constant 0 : i32
    %c0_i32_1 = arith.constant 0 : i32
    return %c0_i32, %c0_i32_0 : i32, i32
  }
  func.func @transform_6(%arg0: i32) -> (i32, i32) {
    %c0_i32 = arith.constant 0 : i32
    %c0_i32_0 = arith.constant 0 : i32
    %c0_i32_1 = arith.constant 0 : i32
    return %c0_i32, %c0_i32_0 : i32, i32
  }
  func.func @transform_7(%arg0: i32) -> (i32, i32) {
    %c0_i32 = arith.constant 0 : i32
    %c0_i32_0 = arith.constant 0 : i32
    %c0_i32_1 = arith.constant 0 : i32
    return %c0_i32, %c0_i32_0 : i32, i32
  }
  func.func @transform_8(%arg0: i32) -> (i32, i32) {
    %c0_i32 = arith.constant 0 : i32
    %c0_i32_0 = arith.constant 0 : i32
    %c0_i32_1 = arith.constant 0 : i32
    return %c0_i32, %c0_i32_0 : i32, i32
  }
  func.func @transform_9(%arg0: i32) -> (i32, i32) {
    %c0_i32 = arith.constant 0 : i32
    %c0_i32_0 = arith.constant 0 : i32
    return %c0_i32, %arg0 : i32, i32
  }
}

</mosaic_0001>

<llo_original>
// kernel: tpu_custom_call.1
$region0: #{tpu_custom_call.1}
  #allocation0 [shape = 'u32[]', space=smem, size = 0x4, offset = 0x4, fixed_abs, tag = 'smem constant byte address 0x4 - core index']
  #allocation1 [shape = 'u32[144,128]{1,0:T(1,128)}', space=vmem, size = 0x12000, scoped, tag = 'internal scratch']
  %s0 = inlined_call_operand.vmem [shape: s32[1,128], index: 0, kind: input, shape index: {}]
  %s1 = inlined_call_operand.vmem [shape: s32[1,128], index: 1, kind: input, shape index: {}]
  %s2 = inlined_call_operand.vmem [shape: f32[32,24], index: 2, kind: input, shape index: {}]
  %s3 = inlined_call_operand.vmem [shape: f32[256,32], index: 3, kind: input, shape index: {}]
  %s4 = inlined_call_operand.vmem [shape: f32[256,32], index: 4, kind: input, shape index: {}]
  %s5 = inlined_call_operand.vmem [shape: f32[256,1], index: 5, kind: input, shape index: {}]
  %s6 = inlined_call_operand.vmem [shape: f32[256,1], index: 6, kind: input, shape index: {}]
  %s7 = inlined_call_operand.vmem [shape: f32[8,256], index: 7, kind: input, shape index: {}]
  %s8 = inlined_call_operand.vmem [shape: f32[8,1], index: 8, kind: input, shape index: {}]
  %s9 = inlined_call_operand.hbm [shape: f32[1,128], index: 9, kind: output, shape index: {}]
  %s10 = sld [smem:[#allocation0]]
  $region46: #{tpu_custom_call.1} parent=0
    _
  %s12 = ssub.s32 1, %s10
  %s13 = scalar_select 0, %s12, %s10
  $region1: #{tpu_custom_call.1} parent=0
    #allocation2 [shape = 'u8[512]{0}', space=vmem, size = 0x400, scoped, tag = 'output window, operand 0, single buffered']
    #allocation3 [shape = 's32[1]{0}', space=sflag, size = 0x4, scoped, tag = 'scoped memory for tpu_custom_call.1']
    %14 = vsyncpa [#allocation3], 0
    // Predicated region
    $region2: #{tpu_custom_call.1} parent=1 // pred_check
      _
    $region3: #{tpu_custom_call.1} parent=1 // pred_check_branch
      %16 = sbr.rel (0) target = $region5
    $region4: #{tpu_custom_call.1} parent=1 // pred_region
      _
    $region5: #{tpu_custom_call.1} parent=1 // pred_fallthru
      _
    // Predicated region
    $region6: #{tpu_custom_call.1} parent=1 // pred_check
      _
    $region7: #{tpu_custom_call.1} parent=1 // pred_check_branch
      %18 = sbr.rel (0) target = $region9
    $region8: #{tpu_custom_call.1} parent=1 // pred_region
      _
    $region9: #{tpu_custom_call.1} parent=1 // pred_fallthru
      _
    // Predicated region
    $region10: #{tpu_custom_call.1} parent=1 // pred_check
      _
    $region11: #{tpu_custom_call.1} parent=1 // pred_check_branch
      %20 = sbr.rel (0) target = $region13
    $region12: #{tpu_custom_call.1} parent=1 // pred_region
      _
    $region13: #{tpu_custom_call.1} parent=1 // pred_fallthru
      _
    // Predicated region
    $region14: #{tpu_custom_call.1} parent=1 // pred_check
      _
    $region15: #{tpu_custom_call.1} parent=1 // pred_check_branch
      %22 = sbr.rel (0) target = $region17
    $region16: #{tpu_custom_call.1} parent=1 // pred_region
      _
    $region17: #{tpu_custom_call.1} parent=1 // pred_fallthru
      _
    // Predicated region
    $region18: #{tpu_custom_call.1} parent=1 // pred_check
      _
    $region19: #{tpu_custom_call.1} parent=1 // pred_check_branch
      %24 = sbr.rel (0) target = $region21
    $region20: #{tpu_custom_call.1} parent=1 // pred_region
      _
    $region21: #{tpu_custom_call.1} parent=1 // pred_fallthru
      _
    // Predicated region
    $region22: #{tpu_custom_call.1} parent=1 // pred_check
      _
    $region23: #{tpu_custom_call.1} parent=1 // pred_check_branch
      %26 = sbr.rel (0) target = $region25
    $region24: #{tpu_custom_call.1} parent=1 // pred_region
      _
    $region25: #{tpu_custom_call.1} parent=1 // pred_fallthru
      _
    // Predicated region
    $region26: #{tpu_custom_call.1} parent=1 // pred_check
      _
    $region27: #{tpu_custom_call.1} parent=1 // pred_check_branch
      %28 = sbr.rel (0) target = $region29
    $region28: #{tpu_custom_call.1} parent=1 // pred_region
      _
    $region29: #{tpu_custom_call.1} parent=1 // pred_fallthru
      _
    // Predicated region
    $region30: #{tpu_custom_call.1} parent=1 // pred_check
      _
    $region31: #{tpu_custom_call.1} parent=1 // pred_check_branch
      %30 = sbr.rel (0) target = $region33
    $region32: #{tpu_custom_call.1} parent=1 // pred_region
      _
    $region33: #{tpu_custom_call.1} parent=1 // pred_fallthru
      _
    // Predicated region
    $region34: #{tpu_custom_call.1} parent=1 // pred_check
      _
    $region35: #{tpu_custom_call.1} parent=1 // pred_check_branch
      %32 = sbr.rel (0) target = $region37
    $region36: #{tpu_custom_call.1} parent=1 // pred_region
      _
    $region37: #{tpu_custom_call.1} parent=1 // pred_fallthru
      _
    %v33 = vld [vmem:[%s2] sm:$0xff]
    %v34 = vld [vmem:[%s2 + $0x8] sm:$0xff]
    %v35 = vld [vmem:[%s2 + $0x10] sm:$0xff]
    %v36 = vld [vmem:[%s2 + $0x18] sm:$0xff]
    %v37 = vlaneseq
    %v38 = vshrl.u32 %v37, 7
    %v39 = vadd.s32 %v38, 8
    %v40 = vadd.s32 %v38, 16
    %v41 = vld [vmem:[%s0] sm:$0x1]
    %v42 = vlaneseq
    %v43 = vshrl.u32 %v42, 7
    %v44 = vsub.s32 0, %v43
    %v45 = vrot.slane %v41, %v44
    %vm46 = vcmp.eq.s32.totalorder %v38, %v45
    %vm47 = vcmp.eq.s32.totalorder %v39, %v45
    %vm48 = vcmp.eq.s32.totalorder %v40, %v45
    %v49 = vsel %vm46, 1, 0
    %v50 = vsel %vm47, 1, 0
    %v51 = vsel %vm48, 1, 0
    %v52 = vcvt.s32.f32 %v49
    %v53 = vcvt.s32.f32 %v50
    %v54 = vcvt.s32.f32 %v51
    %v55 = vld [vmem:[%s1] sm:$0x1]
    %v56 = vlaneseq
    %v57 = vshrl.u32 %v56, 7
    %v58 = vsub.s32 0, %v57
    %v59 = vrot.slane %v55, %v58
    %vm60 = vcmp.eq.s32.totalorder %v38, %v59
    %vm61 = vcmp.eq.s32.totalorder %v39, %v59
    %vm62 = vcmp.eq.s32.totalorder %v40, %v59
    %v63 = vsel %vm60, 1, 0
    %v64 = vsel %vm61, 1, 0
    %v65 = vsel %vm62, 1, 0
    %v66 = vcvt.s32.f32 %v63
    %v67 = vcvt.s32.f32 %v64
    %v68 = vcvt.s32.f32 %v65
    %vm69 = vcmask 195584
    %v71 = vsel %vm69, %v33, 0
    %v74 = vsel %vm69, %v34, 0
    %v77 = vsel %vm69, %v35, 0
    %v80 = vsel %vm69, %v36, 0
    %82 = vmatprep.subr.mxu0 0.0
    %83 = vmatpush1.msra.mxu0 %v52
    %84 = vmatprep.subr.mxu0 0.0
    %85 = vmatpush1.msra.mxu0 %v53
    %86 = vmatprep.subr.mxu0 0.0
    %87 = vmatpush1.msra.mxu0 %v54
    %88 = vmatprep.subr.mxu0 0.0
    %89 = vmatpush1.msra.mxu0 0.0
    %90 = vmatprep.subr.mxu0 0.0
    %91 = vmatpush1.msra.mxu0 0.0
    %92 = vmatprep.subr.mxu0 0.0
    %93 = vmatpush1.msra.mxu0 0.0
    %94 = vmatprep.subr.mxu0 0.0
    %95 = vmatpush1.msra.mxu0 0.0
    %96 = vmatprep.subr.mxu0 0.0
    %97 = vmatpush1.msra.mxu0 0.0
    %98 = vmatprep.subr.mxu0 0.0
    %99 = vmatpush1.msra.mxu0 0.0
    %100 = vmatprep.subr.mxu0 0.0
    %101 = vmatpush1.msra.mxu0 0.0
    %102 = vmatprep.subr.mxu0 0.0
    %103 = vmatpush1.msra.mxu0 0.0
    %104 = vmatprep.subr.mxu0 0.0
    %105 = vmatpush1.msra.mxu0 0.0
    %106 = vmatprep.subr.mxu0 0.0
    %107 = vmatpush1.msra.mxu0 0.0
    %108 = vmatprep.subr.mxu0 0.0
    %109 = vmatpush1.msra.mxu0 0.0
    %110 = vmatprep.subr.mxu0 0.0
    %111 = vmatpush1.msra.mxu0 0.0
    %112 = vmatprep.subr.mxu0 0.0
    %113 = vmatpush1.msra.mxu0 0.0
    %114 = vmatprep.subr.mxu0 0.0
    %115 = vmatpush1.msra.mxu0 0.0
    %116 = vmatprep.subr.mxu0 0.0
    %117 = vmatpush1.msra.mxu0 0.0
    %118 = vmatprep.subr.mxu0 0.0
    %119 = vmatpush1.msra.mxu0 0.0
    %120 = vmatprep.subr.mxu0 0.0
    %121 = vmatpush1.msra.mxu0 0.0
    %122 = vmatprep.subr.mxu0 0.0
    %123 = vmatpush1.msra.mxu0 0.0
    %124 = vmatprep.subr.mxu0 0.0
    %125 = vmatpush1.msra.mxu0 0.0
    %126 = vmatprep.subr.mxu0 0.0
    %127 = vmatpush1.msra.mxu0 0.0
    %128 = vmatprep.subr.mxu0 0.0
    %129 = vmatpush1.msra.mxu0 0.0
    %130 = vmatprep.subr.mxu0 0.0
    %131 = vmatpush1.msra.mxu0 0.0
    %132 = vmatprep.subr.mxu0 0.0
    %133 = vmatpush1.msra.mxu0 0.0
    %134 = vmatprep.subr.mxu0 0.0
    %135 = vmatpush1.msra.mxu0 0.0
    %136 = vmatprep.subr.mxu0 0.0
    %137 = vmatpush1.msra.mxu0 0.0
    %138 = vmatprep.subr.mxu0 0.0
    %139 = vmatpush1.msra.mxu0 0.0
    %140 = vmatprep.subr.mxu0 0.0
    %141 = vmatpush1.msra.mxu0 0.0
    %142 = vmatprep.subr.mxu0 0.0
    %143 = vmatpush1.msra.mxu0 0.0
    %144 = vmatprep.subr.mxu0 0.0
    %145 = vmatpush1.msra.mxu0 0.0
    %146 = vmatprep.mubr.f32.mxu0 0.0
    %147 = vmatmul.mubr.f32.gmra.mrb[0].mxu0 %v71
    %v148 = vpop.f32.mrb[0].mxu0
    %v149 = vadd.f32 0.0, %v148
    %v150 = vpop.f32.mrb[0].mxu0
    %151 = vmatprep.mubr.f32.mxu0 0.0
    %152 = vmatmul.mubr.f32.gmra.mrb[0].mxu0 %v74
    %v153 = vpop.f32.mrb[0].mxu0
    %v154 = vadd.f32 0.0, %v153
    %v155 = vpop.f32.mrb[0].mxu0
    %156 = vmatprep.mubr.f32.mxu0 0.0
    %157 = vmatmul.mubr.f32.gmra.mrb[0].mxu0 %v77
    %v158 = vpop.f32.mrb[0].mxu0
    %v159 = vadd.f32 0.0, %v158
    %v160 = vpop.f32.mrb[0].mxu0
    %161 = vmatprep.mubr.f32.mxu0 0.0
    %162 = vmatmul.mubr.f32.gmra.mrb[0].mxu0 %v80
    %v163 = vpop.f32.mrb[0].mxu0
    %v164 = vadd.f32 0.0, %v163
    %v165 = vpop.f32.mrb[0].mxu0
    %166 = vdwg.mxu0
    %167 = vmatprep.subr.mxu0 0.0
    %168 = vmatpush1.msra.mxu0 %v66
    %169 = vmatprep.subr.mxu0 0.0
    %170 = vmatpush1.msra.mxu0 %v67
    %171 = vmatprep.subr.mxu0 0.0
    %172 = vmatpush1.msra.mxu0 %v68
    %173 = vmatprep.subr.mxu0 0.0
    %174 = vmatpush1.msra.mxu0 0.0
    %175 = vmatprep.subr.mxu0 0.0
    %176 = vmatpush1.msra.mxu0 0.0
    %177 = vmatprep.subr.mxu0 0.0
    %178 = vmatpush1.msra.mxu0 0.0
    %179 = vmatprep.subr.mxu0 0.0
    %180 = vmatpush1.msra.mxu0 0.0
    %181 = vmatprep.subr.mxu0 0.0
    %182 = vmatpush1.msra.mxu0 0.0
    %183 = vmatprep.subr.mxu0 0.0
    %184 = vmatpush1.msra.mxu0 0.0
    %185 = vmatprep.subr.mxu0 0.0
    %186 = vmatpush1.msra.mxu0 0.0
    %187 = vmatprep.subr.mxu0 0.0
    %188 = vmatpush1.msra.mxu0 0.0
    %189 = vmatprep.subr.mxu0 0.0
    %190 = vmatpush1.msra.mxu0 0.0
    %191 = vmatprep.subr.mxu0 0.0
    %192 = vmatpush1.msra.mxu0 0.0
    %193 = vmatprep.subr.mxu0 0.0
    %194 = vmatpush1.msra.mxu0 0.0
    %195 = vmatprep.subr.mxu0 0.0
    %196 = vmatpush1.msra.mxu0 0.0
    %197 = vmatprep.subr.mxu0 0.0
    %198 = vmatpush1.msra.mxu0 0.0
    %199 = vmatprep.subr.mxu0 0.0
    %200 = vmatpush1.msra.mxu0 0.0
    %201 = vmatprep.subr.mxu0 0.0
    %202 = vmatpush1.msra.mxu0 0.0
    %203 = vmatprep.subr.mxu0 0.0
    %204 = vmatpush1.msra.mxu0 0.0
    %205 = vmatprep.subr.mxu0 0.0
    %206 = vmatpush1.msra.mxu0 0.0
    %207 = vmatprep.subr.mxu0 0.0
    %208 = vmatpush1.msra.mxu0 0.0
    %209 = vmatprep.subr.mxu0 0.0
    %210 = vmatpush1.msra.mxu0 0.0
    %211 = vmatprep.subr.mxu0 0.0
    %212 = vmatpush1.msra.mxu0 0.0
    %213 = vmatprep.subr.mxu0 0.0
    %214 = vmatpush1.msra.mxu0 0.0
    %215 = vmatprep.subr.mxu0 0.0
    %216 = vmatpush1.msra.mxu0 0.0
    %217 = vmatprep.subr.mxu0 0.0
    %218 = vmatpush1.msra.mxu0 0.0
    %219 = vmatprep.subr.mxu0 0.0
    %220 = vmatpush1.msra.mxu0 0.0
    %221 = vmatprep.subr.mxu0 0.0
    %222 = vmatpush1.msra.mxu0 0.0
    %223 = vmatprep.subr.mxu0 0.0
    %224 = vmatpush1.msra.mxu0 0.0
    %225 = vmatprep.subr.mxu0 0.0
    %226 = vmatpush1.msra.mxu0 0.0
    %227 = vmatprep.subr.mxu0 0.0
    %228 = vmatpush1.msra.mxu0 0.0
    %229 = vmatprep.subr.mxu0 0.0
    %230 = vmatpush1.msra.mxu0 0.0
    %231 = vmatprep.mubr.f32.mxu0 0.0
    %232 = vmatmul.mubr.f32.gmra.mrb[0].mxu0 %v71
    %v233 = vpop.f32.mrb[0].mxu0
    %v234 = vadd.f32 0.0, %v233
    %v235 = vpop.f32.mrb[0].mxu0
    %236 = vmatprep.mubr.f32.mxu0 0.0
    %237 = vmatmul.mubr.f32.gmra.mrb[0].mxu0 %v74
    %v238 = vpop.f32.mrb[0].mxu0
    %v239 = vadd.f32 0.0, %v238
    %v240 = vpop.f32.mrb[0].mxu0
    %241 = vmatprep.mubr.f32.mxu0 0.0
    %242 = vmatmul.mubr.f32.gmra.mrb[0].mxu0 %v77
    %v243 = vpop.f32.mrb[0].mxu0
    %v244 = vadd.f32 0.0, %v243
    %v245 = vpop.f32.mrb[0].mxu0
    %246 = vmatprep.mubr.f32.mxu0 0.0
    %247 = vmatmul.mubr.f32.gmra.mrb[0].mxu0 %v80
    %v248 = vpop.f32.mrb[0].mxu0
    %v249 = vadd.f32 0.0, %v248
    %v250 = vpop.f32.mrb[0].mxu0
    %251 = vdwg.mxu0
    %v252 = vld [vmem:[%s3] sm:$0xff]
    %v253 = vld [vmem:[%s3 + $0x8] sm:$0xff]
    %v254 = vld [vmem:[%s3 + $0x10] sm:$0xff]
    %v255 = vld [vmem:[%s3 + $0x18] sm:$0xff]
    %v256 = vld [vmem:[%s3 + $0x20] sm:$0xff]
    %v257 = vld [vmem:[%s3 + $0x28] sm:$0xff]
    %v258 = vld [vmem:[%s3 + $0x30] sm:$0xff]
    %v259 = vld [vmem:[%s3 + $0x38] sm:$0xff]
    %v260 = vld [vmem:[%s3 + $0x40] sm:$0xff]
    %v261 = vld [vmem:[%s3 + $0x48] sm:$0xff]
    %v262 = vld [vmem:[%s3 + $0x50] sm:$0xff]
    %v263 = vld [vmem:[%s3 + $0x58] sm:$0xff]
    %v264 = vld [vmem:[%s3 + $0x60] sm:$0xff]
    %v265 = vld [vmem:[%s3 + $0x68] sm:$0xff]
    %v266 = vld [vmem:[%s3 + $0x70] sm:$0xff]
    %v267 = vld [vmem:[%s3 + $0x78] sm:$0xff]
    %v268 = vld [vmem:[%s3 + $0x80] sm:$0xff]
    %v269 = vld [vmem:[%s3 + $0x88] sm:$0xff]
    %v270 = vld [vmem:[%s3 + $0x90] sm:$0xff]
    %v271 = vld [vmem:[%s3 + $0x98] sm:$0xff]
    %v272 = vld [vmem:[%s3 + $0xa0] sm:$0xff]
    %v273 = vld [vmem:[%s3 + $0xa8] sm:$0xff]
    %v274 = vld [vmem:[%s3 + $0xb0] sm:$0xff]
    %v275 = vld [vmem:[%s3 + $0xb8] sm:$0xff]
    %v276 = vld [vmem:[%s3 + $0xc0] sm:$0xff]
    %v277 = vld [vmem:[%s3 + $0xc8] sm:$0xff]
    %v278 = vld [vmem:[%s3 + $0xd0] sm:$0xff]
    %v279 = vld [vmem:[%s3 + $0xd8] sm:$0xff]
    %v280 = vld [vmem:[%s3 + $0xe0] sm:$0xff]
    %v281 = vld [vmem:[%s3 + $0xe8] sm:$0xff]
    %v282 = vld [vmem:[%s3 + $0xf0] sm:$0xff]
    %v283 = vld [vmem:[%s3 + $0xf8] sm:$0xff]
    %v284 = vld [vmem:[%s4] sm:$0xff]
    %v285 = vld [vmem:[%s4 + $0x8] sm:$0xff]
    %v286 = vld [vmem:[%s4 + $0x10] sm:$0xff]
    %v287 = vld [vmem:[%s4 + $0x18] sm:$0xff]
    %v288 = vld [vmem:[%s4 + $0x20] sm:$0xff]
    %v289 = vld [vmem:[%s4 + $0x28] sm:$0xff]
    %v290 = vld [vmem:[%s4 + $0x30] sm:$0xff]
    %v291 = vld [vmem:[%s4 + $0x38] sm:$0xff]
    %v292 = vld [vmem:[%s4 + $0x40] sm:$0xff]
    %v293 = vld [vmem:[%s4 + $0x48] sm:$0xff]
    %v294 = vld [vmem:[%s4 + $0x50] sm:$0xff]
    %v295 = vld [vmem:[%s4 + $0x58] sm:$0xff]
    %v296 = vld [vmem:[%s4 + $0x60] sm:$0xff]
    %v297 = vld [vmem:[%s4 + $0x68] sm:$0xff]
    %v298 = vld [vmem:[%s4 + $0x70] sm:$0xff]
    %v299 = vld [vmem:[%s4 + $0x78] sm:$0xff]
    %v300 = vld [vmem:[%s4 + $0x80] sm:$0xff]
    %v301 = vld [vmem:[%s4 + $0x88] sm:$0xff]
    %v302 = vld [vmem:[%s4 + $0x90] sm:$0xff]
    %v303 = vld [vmem:[%s4 + $0x98] sm:$0xff]
    %v304 = vld [vmem:[%s4 + $0xa0] sm:$0xff]
    %v305 = vld [vmem:[%s4 + $0xa8] sm:$0xff]
    %v306 = vld [vmem:[%s4 + $0xb0] sm:$0xff]
    %v307 = vld [vmem:[%s4 + $0xb8] sm:$0xff]
    %v308 = vld [vmem:[%s4 + $0xc0] sm:$0xff]
    %v309 = vld [vmem:[%s4 + $0xc8] sm:$0xff]
    %v310 = vld [vmem:[%s4 + $0xd0] sm:$0xff]
    %v311 = vld [vmem:[%s4 + $0xd8] sm:$0xff]
    %v312 = vld [vmem:[%s4 + $0xe0] sm:$0xff]
    %v313 = vld [vmem:[%s4 + $0xe8] sm:$0xff]
    %v314 = vld [vmem:[%s4 + $0xf0] sm:$0xff]
    %v315 = vld [vmem:[%s4 + $0xf8] sm:$0xff]
    %v316 = vld [vmem:[%s5] sm:$0xff]
    %v317 = vld [vmem:[%s5 + $0x8] sm:$0xff]
    %v318 = vld [vmem:[%s5 + $0x10] sm:$0xff]
    %v319 = vld [vmem:[%s5 + $0x18] sm:$0xff]
    %v320 = vld [vmem:[%s5 + $0x20] sm:$0xff]
    %v321 = vld [vmem:[%s5 + $0x28] sm:$0xff]
    %v322 = vld [vmem:[%s5 + $0x30] sm:$0xff]
    %v323 = vld [vmem:[%s5 + $0x38] sm:$0xff]
    %v324 = vld [vmem:[%s5 + $0x40] sm:$0xff]
    %v325 = vld [vmem:[%s5 + $0x48] sm:$0xff]
    %v326 = vld [vmem:[%s5 + $0x50] sm:$0xff]
    %v327 = vld [vmem:[%s5 + $0x58] sm:$0xff]
    %v328 = vld [vmem:[%s5 + $0x60] sm:$0xff]
    %v329 = vld [vmem:[%s5 + $0x68] sm:$0xff]
    %v330 = vld [vmem:[%s5 + $0x70] sm:$0xff]
    %v331 = vld [vmem:[%s5 + $0x78] sm:$0xff]
    %v332 = vld [vmem:[%s5 + $0x80] sm:$0xff]
    %v333 = vld [vmem:[%s5 + $0x88] sm:$0xff]
    %v334 = vld [vmem:[%s5 + $0x90] sm:$0xff]
    %v335 = vld [vmem:[%s5 + $0x98] sm:$0xff]
    %v336 = vld [vmem:[%s5 + $0xa0] sm:$0xff]
    %v337 = vld [vmem:[%s5 + $0xa8] sm:$0xff]
    %v338 = vld [vmem:[%s5 + $0xb0] sm:$0xff]
    %v339 = vld [vmem:[%s5 + $0xb8] sm:$0xff]
    %v340 = vld [vmem:[%s5 + $0xc0] sm:$0xff]
    %v341 = vld [vmem:[%s5 + $0xc8] sm:$0xff]
    %v342 = vld [vmem:[%s5 + $0xd0] sm:$0xff]
    %v343 = vld [vmem:[%s5 + $0xd8] sm:$0xff]
    %v344 = vld [vmem:[%s5 + $0xe0] sm:$0xff]
    %v345 = vld [vmem:[%s5 + $0xe8] sm:$0xff]
    %v346 = vld [vmem:[%s5 + $0xf0] sm:$0xff]
    %v347 = vld [vmem:[%s5 + $0xf8] sm:$0xff]
    %349 = vset.pattern.permute.xlu0 0
    %350 = vperm.xlu0 %349, %v316
    %v351 = vpop.permute.xlu0 %350
    %354 = vset.pattern.permute.xlu0 0
    %355 = vperm.xlu0 %354, %v317
    %v356 = vpop.permute.xlu0 %355
    %359 = vset.pattern.permute.xlu0 0
    %360 = vperm.xlu0 %359, %v318
    %v361 = vpop.permute.xlu0 %360
    %364 = vset.pattern.permute.xlu0 0
    %365 = vperm.xlu0 %364, %v319
    %v366 = vpop.permute.xlu0 %365
    %369 = vset.pattern.permute.xlu0 0
    %370 = vperm.xlu0 %369, %v320
    %v371 = vpop.permute.xlu0 %370
    %374 = vset.pattern.permute.xlu0 0
    %375 = vperm.xlu0 %374, %v321
    %v376 = vpop.permute.xlu0 %375
    %379 = vset.pattern.permute.xlu0 0
    %380 = vperm.xlu0 %379, %v322
    %v381 = vpop.permute.xlu0 %380
    %384 = vset.pattern.permute.xlu0 0
    %385 = vperm.xlu0 %384, %v323
    %v386 = vpop.permute.xlu0 %385
    %389 = vset.pattern.permute.xlu0 0
    %390 = vperm.xlu0 %389, %v324
    %v391 = vpop.permute.xlu0 %390
    %394 = vset.pattern.permute.xlu0 0
    %395 = vperm.xlu0 %394, %v325
    %v396 = vpop.permute.xlu0 %395
    %399 = vset.pattern.permute.xlu0 0
    %400 = vperm.xlu0 %399, %v326
    %v401 = vpop.permute.xlu0 %400
    %404 = vset.pattern.permute.xlu0 0
    %405 = vperm.xlu0 %404, %v327
    %v406 = vpop.permute.xlu0 %405
    %409 = vset.pattern.permute.xlu0 0
    %410 = vperm.xlu0 %409, %v328
    %v411 = vpop.permute.xlu0 %410
    %414 = vset.pattern.permute.xlu0 0
    %415 = vperm.xlu0 %414, %v329
    %v416 = vpop.permute.xlu0 %415
    %419 = vset.pattern.permute.xlu0 0
    %420 = vperm.xlu0 %419, %v330
    %v421 = vpop.permute.xlu0 %420
    %424 = vset.pattern.permute.xlu0 0
    %425 = vperm.xlu0 %424, %v331
    %v426 = vpop.permute.xlu0 %425
    %429 = vset.pattern.permute.xlu0 0
    %430 = vperm.xlu0 %429, %v332
    %v431 = vpop.permute.xlu0 %430
    %434 = vset.pattern.permute.xlu0 0
    %435 = vperm.xlu0 %434, %v333
    %v436 = vpop.permute.xlu0 %435
    %439 = vset.pattern.permute.xlu0 0
    %440 = vperm.xlu0 %439, %v334
    %v441 = vpop.permute.xlu0 %440
    %444 = vset.pattern.permute.xlu0 0
    %445 = vperm.xlu0 %444, %v335
    %v446 = vpop.permute.xlu0 %445
    %449 = vset.pattern.permute.xlu0 0
    %450 = vperm.xlu0 %449, %v336
    %v451 = vpop.permute.xlu0 %450
    %454 = vset.pattern.permute.xlu0 0
    %455 = vperm.xlu0 %454, %v337
    %v456 = vpop.permute.xlu0 %455
    %459 = vset.pattern.permute.xlu0 0
    %460 = vperm.xlu0 %459, %v338
    %v461 = vpop.permute.xlu0 %460
    %464 = vset.pattern.permute.xlu0 0
    %465 = vperm.xlu0 %464, %v339
    %v466 = vpop.permute.xlu0 %465
    %469 = vset.pattern.permute.xlu0 0
    %470 = vperm.xlu0 %469, %v340
    %v471 = vpop.permute.xlu0 %470
    %474 = vset.pattern.permute.xlu0 0
    %475 = vperm.xlu0 %474, %v341
    %v476 = vpop.permute.xlu0 %475
    %479 = vset.pattern.permute.xlu0 0
    %480 = vperm.xlu0 %479, %v342
    %v481 = vpop.permute.xlu0 %480
    %484 = vset.pattern.permute.xlu0 0
    %485 = vperm.xlu0 %484, %v343
    %v486 = vpop.permute.xlu0 %485
    %489 = vset.pattern.permute.xlu0 0
    %490 = vperm.xlu0 %489, %v344
    %v491 = vpop.permute.xlu0 %490
    %494 = vset.pattern.permute.xlu0 0
    %495 = vperm.xlu0 %494, %v345
    %v496 = vpop.permute.xlu0 %495
    %499 = vset.pattern.permute.xlu0 0
    %500 = vperm.xlu0 %499, %v346
    %v501 = vpop.permute.xlu0 %500
    %504 = vset.pattern.permute.xlu0 0
    %505 = vperm.xlu0 %504, %v347
    %v506 = vpop.permute.xlu0 %505
    %vm508 = vcmask 261120
    %v510 = vsel %vm508, %v284, 0
    %v513 = vsel %vm508, %v285, 0
    %v516 = vsel %vm508, %v286, 0
    %v519 = vsel %vm508, %v287, 0
    %v522 = vsel %vm508, %v288, 0
    %v525 = vsel %vm508, %v289, 0
    %v528 = vsel %vm508, %v290, 0
    %v531 = vsel %vm508, %v291, 0
    %v534 = vsel %vm508, %v292, 0
    %v537 = vsel %vm508, %v293, 0
    %v540 = vsel %vm508, %v294, 0
    %v543 = vsel %vm508, %v295, 0
    %v546 = vsel %vm508, %v296, 0
    %v549 = vsel %vm508, %v297, 0
    %v552 = vsel %vm508, %v298, 0
    %v555 = vsel %vm508, %v299, 0
    %v558 = vsel %vm508, %v300, 0
    %v561 = vsel %vm508, %v301, 0
    %v564 = vsel %vm508, %v302, 0
    %v567 = vsel %vm508, %v303, 0
    %v570 = vsel %vm508, %v304, 0
    %v573 = vsel %vm508, %v305, 0
    %v576 = vsel %vm508, %v306, 0
    %v579 = vsel %vm508, %v307, 0
    %v582 = vsel %vm508, %v308, 0
    %v585 = vsel %vm508, %v309, 0
    %v588 = vsel %vm508, %v310, 0
    %v591 = vsel %vm508, %v311, 0
    %v594 = vsel %vm508, %v312, 0
    %v597 = vsel %vm508, %v313, 0
    %v600 = vsel %vm508, %v314, 0
    %v603 = vsel %vm508, %v315, 0
    %605 = vmatprep.subr.mxu0 0.0
    %606 = vmatpush1.msra.mxu0 %v149
    %607 = vmatprep.subr.mxu0 0.0
    %608 = vmatpush1.msra.mxu0 %v154
    %609 = vmatprep.subr.mxu0 0.0
    %610 = vmatpush1.msra.mxu0 %v159
    %611 = vmatprep.subr.mxu0 0.0
    %612 = vmatpush1.msra.mxu0 %v164
    %613 = vmatprep.subr.mxu0 0.0
    %614 = vmatpush1.msra.mxu0 0.0
    %615 = vmatprep.subr.mxu0 0.0
    %616 = vmatpush1.msra.mxu0 0.0
    %617 = vmatprep.subr.mxu0 0.0
    %618 = vmatpush1.msra.mxu0 0.0
    %619 = vmatprep.subr.mxu0 0.0
    %620 = vmatpush1.msra.mxu0 0.0
    %621 = vmatprep.subr.mxu0 0.0
    %622 = vmatpush1.msra.mxu0 0.0
    %623 = vmatprep.subr.mxu0 0.0
    %624 = vmatpush1.msra.mxu0 0.0
    %625 = vmatprep.subr.mxu0 0.0
    %626 = vmatpush1.msra.mxu0 0.0
    %627 = vmatprep.subr.mxu0 0.0
    %628 = vmatpush1.msra.mxu0 0.0
    %629 = vmatprep.subr.mxu0 0.0
    %630 = vmatpush1.msra.mxu0 0.0
    %631 = vmatprep.subr.mxu0 0.0
    %632 = vmatpush1.msra.mxu0 0.0
    %633 = vmatprep.subr.mxu0 0.0
    %634 = vmatpush1.msra.mxu0 0.0
    %635 = vmatprep.subr.mxu0 0.0
    %636 = vmatpush1.msra.mxu0 0.0
    %637 = vmatprep.subr.mxu0 0.0
    %638 = vmatpush1.msra.mxu0 0.0
    %639 = vmatprep.subr.mxu0 0.0
    %640 = vmatpush1.msra.mxu0 0.0
    %641 = vmatprep.subr.mxu0 0.0
    %642 = vmatpush1.msra.mxu0 0.0
    %643 = vmatprep.subr.mxu0 0.0
    %644 = vmatpush1.msra.mxu0 0.0
    %645 = vmatprep.subr.mxu0 0.0
    %646 = vmatpush1.msra.mxu0 0.0
    %647 = vmatprep.subr.mxu0 0.0
    %648 = vmatpush1.msra.mxu0 0.0
    %649 = vmatprep.subr.mxu0 0.0
    %650 = vmatpush1.msra.mxu0 0.0
    %651 = vmatprep.subr.mxu0 0.0
    %652 = vmatpush1.msra.mxu0 0.0
    %653 = vmatprep.subr.mxu0 0.0
    %654 = vmatpush1.msra.mxu0 0.0
    %655 = vmatprep.subr.mxu0 0.0
    %656 = vmatpush1.msra.mxu0 0.0
    %657 = vmatprep.subr.mxu0 0.0
    %658 = vmatpush1.msra.mxu0 0.0
    %659 = vmatprep.subr.mxu0 0.0
    %660 = vmatpush1.msra.mxu0 0.0
    %661 = vmatprep.subr.mxu0 0.0
    %662 = vmatpush1.msra.mxu0 0.0
    %663 = vmatprep.subr.mxu0 0.0
    %664 = vmatpush1.msra.mxu0 0.0
    %665 = vmatprep.subr.mxu0 0.0
    %666 = vmatpush1.msra.mxu0 0.0
    %667 = vmatprep.subr.mxu0 0.0
    %668 = vmatpush1.msra.mxu0 0.0
    %669 = vmatprep.mubr.f32.mxu0 0.0
    %670 = vmatmul.mubr.f32.gmra.mrb[0].mxu0 %v510
    %v671 = vpop.f32.mrb[0].mxu0
    %v672 = vadd.f32 %v351, %v671
    %v673 = vpop.f32.mrb[0].mxu0
    %674 = vmatprep.mubr.f32.mxu0 0.0
    %675 = vmatmul.mubr.f32.gmra.mrb[0].mxu0 %v513
    %v676 = vpop.f32.mrb[0].mxu0
    %v677 = vadd.f32 %v356, %v676
    %v678 = vpop.f32.mrb[0].mxu0
    %679 = vmatprep.mubr.f32.mxu0 0.0
    %680 = vmatmul.mubr.f32.gmra.mrb[0].mxu0 %v516
    %v681 = vpop.f32.mrb[0].mxu0
    %v682 = vadd.f32 %v361, %v681
    %v683 = vpop.f32.mrb[0].mxu0
    %684 = vmatprep.mubr.f32.mxu0 0.0
    %685 = vmatmul.mubr.f32.gmra.mrb[0].mxu0 %v519
    %v686 = vpop.f32.mrb[0].mxu0
    %v687 = vadd.f32 %v366, %v686
    %v688 = vpop.f32.mrb[0].mxu0
    %689 = vmatprep.mubr.f32.mxu0 0.0
    %690 = vmatmul.mubr.f32.gmra.mrb[0].mxu0 %v522
    %v691 = vpop.f32.mrb[0].mxu0
    %v692 = vadd.f32 %v371, %v691
    %v693 = vpop.f32.mrb[0].mxu0
    %694 = vmatprep.mubr.f32.mxu0 0.0
    %695 = vmatmul.mubr.f32.gmra.mrb[0].mxu0 %v525
    %v696 = vpop.f32.mrb[0].mxu0
    %v697 = vadd.f32 %v376, %v696
    %v698 = vpop.f32.mrb[0].mxu0
    %699 = vmatprep.mubr.f32.mxu0 0.0
    %700 = vmatmul.mubr.f32.gmra.mrb[0].mxu0 %v528
    %v701 = vpop.f32.mrb[0].mxu0
    %v702 = vadd.f32 %v381, %v701
    %v703 = vpop.f32.mrb[0].mxu0
    %704 = vmatprep.mubr.f32.mxu0 0.0
    %705 = vmatmul.mubr.f32.gmra.mrb[0].mxu0 %v531
    %v706 = vpop.f32.mrb[0].mxu0
    %v707 = vadd.f32 %v386, %v706
    %v708 = vpop.f32.mrb[0].mxu0
    %709 = vmatprep.mubr.f32.mxu0 0.0
    %710 = vmatmul.mubr.f32.gmra.mrb[0].mxu0 %v534
    %v711 = vpop.f32.mrb[0].mxu0
    %v712 = vadd.f32 %v391, %v711
    %v713 = vpop.f32.mrb[0].mxu0
    %714 = vmatprep.mubr.f32.mxu0 0.0
    %715 = vmatmul.mubr.f32.gmra.mrb[0].mxu0 %v537
    %v716 = vpop.f32.mrb[0].mxu0
    %v717 = vadd.f32 %v396, %v716
    %v718 = vpop.f32.mrb[0].mxu0
    %719 = vmatprep.mubr.f32.mxu0 0.0
    %720 = vmatmul.mubr.f32.gmra.mrb[0].mxu0 %v540
    %v721 = vpop.f32.mrb[0].mxu0
    %v722 = vadd.f32 %v401, %v721
    %v723 = vpop.f32.mrb[0].mxu0
    %724 = vmatprep.mubr.f32.mxu0 0.0
    %725 = vmatmul.mubr.f32.gmra.mrb[0].mxu0 %v543
    %v726 = vpop.f32.mrb[0].mxu0
    %v727 = vadd.f32 %v406, %v726
    %v728 = vpop.f32.mrb[0].mxu0
    %729 = vmatprep.mubr.f32.mxu0 0.0
    %730 = vmatmul.mubr.f32.gmra.mrb[0].mxu0 %v546
    %v731 = vpop.f32.mrb[0].mxu0
    %v732 = vadd.f32 %v411, %v731
    %v733 = vpop.f32.mrb[0].mxu0
    %734 = vmatprep.mubr.f32.mxu0 0.0
    %735 = vmatmul.mubr.f32.gmra.mrb[0].mxu0 %v549
    %v736 = vpop.f32.mrb[0].mxu0
    %v737 = vadd.f32 %v416, %v736
    %v738 = vpop.f32.mrb[0].mxu0
    %739 = vmatprep.mubr.f32.mxu0 0.0
    %740 = vmatmul.mubr.f32.gmra.mrb[0].mxu0 %v552
    %v741 = vpop.f32.mrb[0].mxu0
    %v742 = vadd.f32 %v421, %v741
    %v743 = vpop.f32.mrb[0].mxu0
    %744 = vmatprep.mubr.f32.mxu0 0.0
    %745 = vmatmul.mubr.f32.gmra.mrb[0].mxu0 %v555
    %v746 = vpop.f32.mrb[0].mxu0
    %v747 = vadd.f32 %v426, %v746
    %v748 = vpop.f32.mrb[0].mxu0
    %749 = vmatprep.mubr.f32.mxu0 0.0
    %750 = vmatmul.mubr.f32.gmra.mrb[0].mxu0 %v558
    %v751 = vpop.f32.mrb[0].mxu0
    %v752 = vadd.f32 %v431, %v751
    %v753 = vpop.f32.mrb[0].mxu0
    %754 = vmatprep.mubr.f32.mxu0 0.0
    %755 = vmatmul.mubr.f32.gmra.mrb[0].mxu0 %v561
    %v756 = vpop.f32.mrb[0].mxu0
    %v757 = vadd.f32 %v436, %v756
    %v758 = vpop.f32.mrb[0].mxu0
    %759 = vmatprep.mubr.f32.mxu0 0.0
    %760 = vmatmul.mubr.f32.gmra.mrb[0].mxu0 %v564
    %v761 = vpop.f32.mrb[0].mxu0
    %v762 = vadd.f32 %v441, %v761
    %v763 = vpop.f32.mrb[0].mxu0
    %764 = vmatprep.mubr.f32.mxu0 0.0
    %765 = vmatmul.mubr.f32.gmra.mrb[0].mxu0 %v567
    %v766 = vpop.f32.mrb[0].mxu0
    %v767 = vadd.f32 %v446, %v766
    %v768 = vpop.f32.mrb[0].mxu0
    %769 = vmatprep.mubr.f32.mxu0 0.0
    %770 = vmatmul.mubr.f32.gmra.mrb[0].mxu0 %v570
    %v771 = vpop.f32.mrb[0].mxu0
    %v772 = vadd.f32 %v451, %v771
    %v773 = vpop.f32.mrb[0].mxu0
    %774 = vmatprep.mubr.f32.mxu0 0.0
    %775 = vmatmul.mubr.f32.gmra.mrb[0].mxu0 %v573
    %v776 = vpop.f32.mrb[0].mxu0
    %v777 = vadd.f32 %v456, %v776
    %v778 = vpop.f32.mrb[0].mxu0
    %779 = vmatprep.mubr.f32.mxu0 0.0
    %780 = vmatmul.mubr.f32.gmra.mrb[0].mxu0 %v576
    %v781 = vpop.f32.mrb[0].mxu0
    %v782 = vadd.f32 %v461, %v781
    %v783 = vpop.f32.mrb[0].mxu0
    %784 = vmatprep.mubr.f32.mxu0 0.0
    %785 = vmatmul.mubr.f32.gmra.mrb[0].mxu0 %v579
    %v786 = vpop.f32.mrb[0].mxu0
    %v787 = vadd.f32 %v466, %v786
    %v788 = vpop.f32.mrb[0].mxu0
    %789 = vmatprep.mubr.f32.mxu0 0.0
    %790 = vmatmul.mubr.f32.gmra.mrb[0].mxu0 %v582
    %v791 = vpop.f32.mrb[0].mxu0
    %v792 = vadd.f32 %v471, %v791
    %v793 = vpop.f32.mrb[0].mxu0
    %794 = vmatprep.mubr.f32.mxu0 0.0
    %795 = vmatmul.mubr.f32.gmra.mrb[0].mxu0 %v585
    %v796 = vpop.f32.mrb[0].mxu0
    %v797 = vadd.f32 %v476, %v796
    %v798 = vpop.f32.mrb[0].mxu0
    %799 = vmatprep.mubr.f32.mxu0 0.0
    %800 = vmatmul.mubr.f32.gmra.mrb[0].mxu0 %v588
    %v801 = vpop.f32.mrb[0].mxu0
    %v802 = vadd.f32 %v481, %v801
    %v803 = vpop.f32.mrb[0].mxu0
    %804 = vmatprep.mubr.f32.mxu0 0.0
    %805 = vmatmul.mubr.f32.gmra.mrb[0].mxu0 %v591
    %v806 = vpop.f32.mrb[0].mxu0
    %v807 = vadd.f32 %v486, %v806
    %v808 = vpop.f32.mrb[0].mxu0
    %809 = vmatprep.mubr.f32.mxu0 0.0
    %810 = vmatmul.mubr.f32.gmra.mrb[0].mxu0 %v594
    %v811 = vpop.f32.mrb[0].mxu0
    %v812 = vadd.f32 %v491, %v811
    %v813 = vpop.f32.mrb[0].mxu0
    %814 = vmatprep.mubr.f32.mxu0 0.0
    %815 = vmatmul.mubr.f32.gmra.mrb[0].mxu0 %v597
    %v816 = vpop.f32.mrb[0].mxu0
    %v817 = vadd.f32 %v496, %v816
    %v818 = vpop.f32.mrb[0].mxu0
    %819 = vmatprep.mubr.f32.mxu0 0.0
    %820 = vmatmul.mubr.f32.gmra.mrb[0].mxu0 %v600
    %v821 = vpop.f32.mrb[0].mxu0
    %v822 = vadd.f32 %v501, %v821
    %v823 = vpop.f32.mrb[0].mxu0
    %824 = vmatprep.mubr.f32.mxu0 0.0
    %825 = vmatmul.mubr.f32.gmra.mrb[0].mxu0 %v603
    %v826 = vpop.f32.mrb[0].mxu0
    %v827 = vadd.f32 %v506, %v826
    %v828 = vpop.f32.mrb[0].mxu0
    %829 = vdwg.mxu0
    %v830 = vld [vmem:[%s6] sm:$0xff]
    %v831 = vld [vmem:[%s6 + $0x8] sm:$0xff]
    %v832 = vld [vmem:[%s6 + $0x10] sm:$0xff]
    %v833 = vld [vmem:[%s6 + $0x18] sm:$0xff]
    %v834 = vld [vmem:[%s6 + $0x20] sm:$0xff]
    %v835 = vld [vmem:[%s6 + $0x28] sm:$0xff]
    %v836 = vld [vmem:[%s6 + $0x30] sm:$0xff]
    %v837 = vld [vmem:[%s6 + $0x38] sm:$0xff]
    %v838 = vld [vmem:[%s6 + $0x40] sm:$0xff]
    %v839 = vld [vmem:[%s6 + $0x48] sm:$0xff]
    %v840 = vld [vmem:[%s6 + $0x50] sm:$0xff]
    %v841 = vld [vmem:[%s6 + $0x58] sm:$0xff]
    %v842 = vld [vmem:[%s6 + $0x60] sm:$0xff]
    %v843 = vld [vmem:[%s6 + $0x68] sm:$0xff]
    %v844 = vld [vmem:[%s6 + $0x70] sm:$0xff]
    %v845 = vld [vmem:[%s6 + $0x78] sm:$0xff]
    %v846 = vld [vmem:[%s6 + $0x80] sm:$0xff]
    %v847 = vld [vmem:[%s6 + $0x88] sm:$0xff]
    %v848 = vld [vmem:[%s6 + $0x90] sm:$0xff]
    %v849 = vld [vmem:[%s6 + $0x98] sm:$0xff]
    %v850 = vld [vmem:[%s6 + $0xa0] sm:$0xff]
    %v851 = vld [vmem:[%s6 + $0xa8] sm:$0xff]
    %v852 = vld [vmem:[%s6 + $0xb0] sm:$0xff]
    %v853 = vld [vmem:[%s6 + $0xb8] sm:$0xff]
    %v854 = vld [vmem:[%s6 + $0xc0] sm:$0xff]
    %v855 = vld [vmem:[%s6 + $0xc8] sm:$0xff]
    %v856 = vld [vmem:[%s6 + $0xd0] sm:$0xff]
    %v857 = vld [vmem:[%s6 + $0xd8] sm:$0xff]
    %v858 = vld [vmem:[%s6 + $0xe0] sm:$0xff]
    %v859 = vld [vmem:[%s6 + $0xe8] sm:$0xff]
    %v860 = vld [vmem:[%s6 + $0xf0] sm:$0xff]
    %v861 = vld [vmem:[%s6 + $0xf8] sm:$0xff]
    %863 = vset.pattern.permute.xlu0 0
    %864 = vperm.xlu0 %863, %v830
    %v865 = vpop.permute.xlu0 %864
    %868 = vset.pattern.permute.xlu0 0
    %869 = vperm.xlu0 %868, %v831
    %v870 = vpop.permute.xlu0 %869
    %873 = vset.pattern.permute.xlu0 0
    %874 = vperm.xlu0 %873, %v832
    %v875 = vpop.permute.xlu0 %874
    %878 = vset.pattern.permute.xlu0 0
    %879 = vperm.xlu0 %878, %v833
    %v880 = vpop.permute.xlu0 %879
    %883 = vset.pattern.permute.xlu0 0
    %884 = vperm.xlu0 %883, %v834
    %v885 = vpop.permute.xlu0 %884
    %888 = vset.pattern.permute.xlu0 0
    %889 = vperm.xlu0 %888, %v835
    %v890 = vpop.permute.xlu0 %889
    %893 = vset.pattern.permute.xlu0 0
    %894 = vperm.xlu0 %893, %v836
    %v895 = vpop.permute.xlu0 %894
    %898 = vset.pattern.permute.xlu0 0
    %899 = vperm.xlu0 %898, %v837
    %v900 = vpop.permute.xlu0 %899
    %903 = vset.pattern.permute.xlu0 0
    %904 = vperm.xlu0 %903, %v838
    %v905 = vpop.permute.xlu0 %904
    %908 = vset.pattern.permute.xlu0 0
    %909 = vperm.xlu0 %908, %v839
    %v910 = vpop.permute.xlu0 %909
    %913 = vset.pattern.permute.xlu0 0
    %914 = vperm.xlu0 %913, %v840
    %v915 = vpop.permute.xlu0 %914
    %918 = vset.pattern.permute.xlu0 0
    %919 = vperm.xlu0 %918, %v841
    %v920 = vpop.permute.xlu0 %919
    %923 = vset.pattern.permute.xlu0 0
    %924 = vperm.xlu0 %923, %v842
    %v925 = vpop.permute.xlu0 %924
    %928 = vset.pattern.permute.xlu0 0
    %929 = vperm.xlu0 %928, %v843
    %v930 = vpop.permute.xlu0 %929
    %933 = vset.pattern.permute.xlu0 0
    %934 = vperm.xlu0 %933, %v844
    %v935 = vpop.permute.xlu0 %934
    %938 = vset.pattern.permute.xlu0 0
    %939 = vperm.xlu0 %938, %v845
    %v940 = vpop.permute.xlu0 %939
    %943 = vset.pattern.permute.xlu0 0
    %944 = vperm.xlu0 %943, %v846
    %v945 = vpop.permute.xlu0 %944
    %948 = vset.pattern.permute.xlu0 0
    %949 = vperm.xlu0 %948, %v847
    %v950 = vpop.permute.xlu0 %949
    %953 = vset.pattern.permute.xlu0 0
    %954 = vperm.xlu0 %953, %v848
    %v955 = vpop.permute.xlu0 %954
    %958 = vset.pattern.permute.xlu0 0
    %959 = vperm.xlu0 %958, %v849
    %v960 = vpop.permute.xlu0 %959
    %963 = vset.pattern.permute.xlu0 0
    %964 = vperm.xlu0 %963, %v850
    %v965 = vpop.permute.xlu0 %964
    %968 = vset.pattern.permute.xlu0 0
    %969 = vperm.xlu0 %968, %v851
    %v970 = vpop.permute.xlu0 %969
    %973 = vset.pattern.permute.xlu0 0
    %974 = vperm.xlu0 %973, %v852
    %v975 = vpop.permute.xlu0 %974
    %978 = vset.pattern.permute.xlu0 0
    %979 = vperm.xlu0 %978, %v853
    %v980 = vpop.permute.xlu0 %979
    %983 = vset.pattern.permute.xlu0 0
    %984 = vperm.xlu0 %983, %v854
    %v985 = vpop.permute.xlu0 %984
    %988 = vset.pattern.permute.xlu0 0
    %989 = vperm.xlu0 %988, %v855
    %v990 = vpop.permute.xlu0 %989
    %993 = vset.pattern.permute.xlu0 0
    %994 = vperm.xlu0 %993, %v856
    %v995 = vpop.permute.xlu0 %994
    %998 = vset.pattern.permute.xlu0 0
    %999 = vperm.xlu0 %998, %v857
    %v1000 = vpop.permute.xlu0 %999
    %1003 = vset.pattern.permute.xlu0 0
    %1004 = vperm.xlu0 %1003, %v858
    %v1005 = vpop.permute.xlu0 %1004
    %1008 = vset.pattern.permute.xlu0 0
    %1009 = vperm.xlu0 %1008, %v859
    %v1010 = vpop.permute.xlu0 %1009
    %1013 = vset.pattern.permute.xlu0 0
    %1014 = vperm.xlu0 %1013, %v860
    %v1015 = vpop.permute.xlu0 %1014
    %1018 = vset.pattern.permute.xlu0 0
    %1019 = vperm.xlu0 %1018, %v861
    %v1020 = vpop.permute.xlu0 %1019
    %v1023 = vsel %vm508, %v252, 0
    %v1026 = vsel %vm508, %v253, 0
    %v1029 = vsel %vm508, %v254, 0
    %v1032 = vsel %vm508, %v255, 0
    %v1035 = vsel %vm508, %v256, 0
    %v1038 = vsel %vm508, %v257, 0
    %v1041 = vsel %vm508, %v258, 0
    %v1044 = vsel %vm508, %v259, 0
    %v1047 = vsel %vm508, %v260, 0
    %v1050 = vsel %vm508, %v261, 0
    %v1053 = vsel %vm508, %v262, 0
    %v1056 = vsel %vm508, %v263, 0
    %v1059 = vsel %vm508, %v264, 0
    %v1062 = vsel %vm508, %v265, 0
    %v1065 = vsel %vm508, %v266, 0
    %v1068 = vsel %vm508, %v267, 0
    %v1071 = vsel %vm508, %v268, 0
    %v1074 = vsel %vm508, %v269, 0
    %v1077 = vsel %vm508, %v270, 0
    %v1080 = vsel %vm508, %v271, 0
    %v1083 = vsel %vm508, %v272, 0
    %v1086 = vsel %vm508, %v273, 0
    %v1089 = vsel %vm508, %v274, 0
    %v1092 = vsel %vm508, %v275, 0
    %v1095 = vsel %vm508, %v276, 0
    %v1098 = vsel %vm508, %v277, 0
    %v1101 = vsel %vm508, %v278, 0
    %v1104 = vsel %vm508, %v279, 0
    %v1107 = vsel %vm508, %v280, 0
    %v1110 = vsel %vm508, %v281, 0
    %v1113 = vsel %vm508, %v282, 0
    %v1116 = vsel %vm508, %v283, 0
    %1118 = vmatprep.subr.mxu0 0.0
    %1119 = vmatpush1.msra.mxu0 %v234
    %1120 = vmatprep.subr.mxu0 0.0
    %1121 = vmatpush1.msra.mxu0 %v239
    %1122 = vmatprep.subr.mxu0 0.0
    %1123 = vmatpush1.msra.mxu0 %v244
    %1124 = vmatprep.subr.mxu0 0.0
    %1125 = vmatpush1.msra.mxu0 %v249
    %1126 = vmatprep.subr.mxu0 0.0
    %1127 = vmatpush1.msra.mxu0 0.0
    %1128 = vmatprep.subr.mxu0 0.0
    %1129 = vmatpush1.msra.mxu0 0.0
    %1130 = vmatprep.subr.mxu0 0.0
    %1131 = vmatpush1.msra.mxu0 0.0
    %1132 = vmatprep.subr.mxu0 0.0
    %1133 = vmatpush1.msra.mxu0 0.0
    %1134 = vmatprep.subr.mxu0 0.0
    %1135 = vmatpush1.msra.mxu0 0.0
    %1136 = vmatprep.subr.mxu0 0.0
    %1137 = vmatpush1.msra.mxu0 0.0
    %1138 = vmatprep.subr.mxu0 0.0
    %1139 = vmatpush1.msra.mxu0 0.0
    %1140 = vmatprep.subr.mxu0 0.0
    %1141 = vmatpush1.msra.mxu0 0.0
    %1142 = vmatprep.subr.mxu0 0.0
    %1143 = vmatpush1.msra.mxu0 0.0
    %1144 = vmatprep.subr.mxu0 0.0
    %1145 = vmatpush1.msra.mxu0 0.0
    %1146 = vmatprep.subr.mxu0 0.0
    %1147 = vmatpush1.msra.mxu0 0.0
    %1148 = vmatprep.subr.mxu0 0.0
    %1149 = vmatpush1.msra.mxu0 0.0
    %1150 = vmatprep.subr.mxu0 0.0
    %1151 = vmatpush1.msra.mxu0 0.0
    %1152 = vmatprep.subr.mxu0 0.0
    %1153 = vmatpush1.msra.mxu0 0.0
    %1154 = vmatprep.subr.mxu0 0.0
    %1155 = vmatpush1.msra.mxu0 0.0
    %1156 = vmatprep.subr.mxu0 0.0
    %1157 = vmatpush1.msra.mxu0 0.0
    %1158 = vmatprep.subr.mxu0 0.0
    %1159 = vmatpush1.msra.mxu0 0.0
    %1160 = vmatprep.subr.mxu0 0.0
    %1161 = vmatpush1.msra.mxu0 0.0
    %1162 = vmatprep.subr.mxu0 0.0
    %1163 = vmatpush1.msra.mxu0 0.0
    %1164 = vmatprep.subr.mxu0 0.0
    %1165 = vmatpush1.msra.mxu0 0.0
    %1166 = vmatprep.subr.mxu0 0.0
    %1167 = vmatpush1.msra.mxu0 0.0
    %1168 = vmatprep.subr.mxu0 0.0
    %1169 = vmatpush1.msra.mxu0 0.0
    %1170 = vmatprep.subr.mxu0 0.0
    %1171 = vmatpush1.msra.mxu0 0.0
    %1172 = vmatprep.subr.mxu0 0.0
    %1173 = vmatpush1.msra.mxu0 0.0
    %1174 = vmatprep.subr.mxu0 0.0
    %1175 = vmatpush1.msra.mxu0 0.0
    %1176 = vmatprep.subr.mxu0 0.0
    %1177 = vmatpush1.msra.mxu0 0.0
    %1178 = vmatprep.subr.mxu0 0.0
    %1179 = vmatpush1.msra.mxu0 0.0
    %1180 = vmatprep.subr.mxu0 0.0
    %1181 = vmatpush1.msra.mxu0 0.0
    %1182 = vmatprep.mubr.f32.mxu0 0.0
    %1183 = vmatmul.mubr.f32.gmra.mrb[0].mxu0 %v1023
    %v1184 = vpop.f32.mrb[0].mxu0
    %v1185 = vadd.f32 %v865, %v1184
    %v1186 = vpop.f32.mrb[0].mxu0
    %1187 = vmatprep.mubr.f32.mxu0 0.0
    %1188 = vmatmul.mubr.f32.gmra.mrb[0].mxu0 %v1026
    %v1189 = vpop.f32.mrb[0].mxu0
    %v1190 = vadd.f32 %v870, %v1189
    %v1191 = vpop.f32.mrb[0].mxu0
    %1192 = vmatprep.mubr.f32.mxu0 0.0
    %1193 = vmatmul.mubr.f32.gmra.mrb[0].mxu0 %v1029
    %v1194 = vpop.f32.mrb[0].mxu0
    %v1195 = vadd.f32 %v875, %v1194
    %v1196 = vpop.f32.mrb[0].mxu0
    %1197 = vmatprep.mubr.f32.mxu0 0.0
    %1198 = vmatmul.mubr.f32.gmra.mrb[0].mxu0 %v1032
    %v1199 = vpop.f32.mrb[0].mxu0
    %v1200 = vadd.f32 %v880, %v1199
    %v1201 = vpop.f32.mrb[0].mxu0
    %1202 = vmatprep.mubr.f32.mxu0 0.0
    %1203 = vmatmul.mubr.f32.gmra.mrb[0].mxu0 %v1035
    %v1204 = vpop.f32.mrb[0].mxu0
    %v1205 = vadd.f32 %v885, %v1204
    %v1206 = vpop.f32.mrb[0].mxu0
    %1207 = vmatprep.mubr.f32.mxu0 0.0
    %1208 = vmatmul.mubr.f32.gmra.mrb[0].mxu0 %v1038
    %v1209 = vpop.f32.mrb[0].mxu0
    %v1210 = vadd.f32 %v890, %v1209
    %v1211 = vpop.f32.mrb[0].mxu0
    %1212 = vmatprep.mubr.f32.mxu0 0.0
    %1213 = vmatmul.mubr.f32.gmra.mrb[0].mxu0 %v1041
    %v1214 = vpop.f32.mrb[0].mxu0
    %v1215 = vadd.f32 %v895, %v1214
    %v1216 = vpop.f32.mrb[0].mxu0
    %1217 = vmatprep.mubr.f32.mxu0 0.0
    %1218 = vmatmul.mubr.f32.gmra.mrb[0].mxu0 %v1044
    %v1219 = vpop.f32.mrb[0].mxu0
    %v1220 = vadd.f32 %v900, %v1219
    %v1221 = vpop.f32.mrb[0].mxu0
    %1222 = vmatprep.mubr.f32.mxu0 0.0
    %1223 = vmatmul.mubr.f32.gmra.mrb[0].mxu0 %v1047
    %v1224 = vpop.f32.mrb[0].mxu0
    %v1225 = vadd.f32 %v905, %v1224
    %v1226 = vpop.f32.mrb[0].mxu0
    %1227 = vmatprep.mubr.f32.mxu0 0.0
    %1228 = vmatmul.mubr.f32.gmra.mrb[0].mxu0 %v1050
    %v1229 = vpop.f32.mrb[0].mxu0
    %v1230 = vadd.f32 %v910, %v1229
    %v1231 = vpop.f32.mrb[0].mxu0
    %1232 = vmatprep.mubr.f32.mxu0 0.0
    %1233 = vmatmul.mubr.f32.gmra.mrb[0].mxu0 %v1053
    %v1234 = vpop.f32.mrb[0].mxu0
    %v1235 = vadd.f32 %v915, %v1234
    %v1236 = vpop.f32.mrb[0].mxu0
    %1237 = vmatprep.mubr.f32.mxu0 0.0
    %1238 = vmatmul.mubr.f32.gmra.mrb[0].mxu0 %v1056
    %v1239 = vpop.f32.mrb[0].mxu0
    %v1240 = vadd.f32 %v920, %v1239
    %v1241 = vpop.f32.mrb[0].mxu0
    %1242 = vmatprep.mubr.f32.mxu0 0.0
    %1243 = vmatmul.mubr.f32.gmra.mrb[0].mxu0 %v1059
    %v1244 = vpop.f32.mrb[0].mxu0
    %v1245 = vadd.f32 %v925, %v1244
    %v1246 = vpop.f32.mrb[0].mxu0
    %1247 = vmatprep.mubr.f32.mxu0 0.0
    %1248 = vmatmul.mubr.f32.gmra.mrb[0].mxu0 %v1062
    %v1249 = vpop.f32.mrb[0].mxu0
    %v1250 = vadd.f32 %v930, %v1249
    %v1251 = vpop.f32.mrb[0].mxu0
    %1252 = vmatprep.mubr.f32.mxu0 0.0
    %1253 = vmatmul.mubr.f32.gmra.mrb[0].mxu0 %v1065
    %v1254 = vpop.f32.mrb[0].mxu0
    %v1255 = vadd.f32 %v935, %v1254
    %v1256 = vpop.f32.mrb[0].mxu0
    %1257 = vmatprep.mubr.f32.mxu0 0.0
    %1258 = vmatmul.mubr.f32.gmra.mrb[0].mxu0 %v1068
    %v1259 = vpop.f32.mrb[0].mxu0
    %v1260 = vadd.f32 %v940, %v1259
    %v1261 = vpop.f32.mrb[0].mxu0
    %1262 = vmatprep.mubr.f32.mxu0 0.0
    %1263 = vmatmul.mubr.f32.gmra.mrb[0].mxu0 %v1071
    %v1264 = vpop.f32.mrb[0].mxu0
    %v1265 = vadd.f32 %v945, %v1264
    %v1266 = vpop.f32.mrb[0].mxu0
    %1267 = vmatprep.mubr.f32.mxu0 0.0
    %1268 = vmatmul.mubr.f32.gmra.mrb[0].mxu0 %v1074
    %v1269 = vpop.f32.mrb[0].mxu0
    %v1270 = vadd.f32 %v950, %v1269
    %v1271 = vpop.f32.mrb[0].mxu0
    %1272 = vmatprep.mubr.f32.mxu0 0.0
    %1273 = vmatmul.mubr.f32.gmra.mrb[0].mxu0 %v1077
    %v1274 = vpop.f32.mrb[0].mxu0
    %v1275 = vadd.f32 %v955, %v1274
    %v1276 = vpop.f32.mrb[0].mxu0
    %1277 = vmatprep.mubr.f32.mxu0 0.0
    %1278 = vmatmul.mubr.f32.gmra.mrb[0].mxu0 %v1080
    %v1279 = vpop.f32.mrb[0].mxu0
    %v1280 = vadd.f32 %v960, %v1279
    %v1281 = vpop.f32.mrb[0].mxu0
    %1282 = vmatprep.mubr.f32.mxu0 0.0
    %1283 = vmatmul.mubr.f32.gmra.mrb[0].mxu0 %v1083
    %v1284 = vpop.f32.mrb[0].mxu0
    %v1285 = vadd.f32 %v965, %v1284
    %v1286 = vpop.f32.mrb[0].mxu0
    %1287 = vmatprep.mubr.f32.mxu0 0.0
    %1288 = vmatmul.mubr.f32.gmra.mrb[0].mxu0 %v1086
    %v1289 = vpop.f32.mrb[0].mxu0
    %v1290 = vadd.f32 %v970, %v1289
    %v1291 = vpop.f32.mrb[0].mxu0
    %1292 = vmatprep.mubr.f32.mxu0 0.0
    %1293 = vmatmul.mubr.f32.gmra.mrb[0].mxu0 %v1089
    %v1294 = vpop.f32.mrb[0].mxu0
    %v1295 = vadd.f32 %v975, %v1294
    %v1296 = vpop.f32.mrb[0].mxu0
    %1297 = vmatprep.mubr.f32.mxu0 0.0
    %1298 = vmatmul.mubr.f32.gmra.mrb[0].mxu0 %v1092
    %v1299 = vpop.f32.mrb[0].mxu0
    %v1300 = vadd.f32 %v980, %v1299
    %v1301 = vpop.f32.mrb[0].mxu0
    %1302 = vmatprep.mubr.f32.mxu0 0.0
    %1303 = vmatmul.mubr.f32.gmra.mrb[0].mxu0 %v1095
    %v1304 = vpop.f32.mrb[0].mxu0
    %v1305 = vadd.f32 %v985, %v1304
    %v1306 = vpop.f32.mrb[0].mxu0
    %1307 = vmatprep.mubr.f32.mxu0 0.0
    %1308 = vmatmul.mubr.f32.gmra.mrb[0].mxu0 %v1098
    %v1309 = vpop.f32.mrb[0].mxu0
    %v1310 = vadd.f32 %v990, %v1309
    %v1311 = vpop.f32.mrb[0].mxu0
    %1312 = vmatprep.mubr.f32.mxu0 0.0
    %1313 = vmatmul.mubr.f32.gmra.mrb[0].mxu0 %v1101
    %v1314 = vpop.f32.mrb[0].mxu0
    %v1315 = vadd.f32 %v995, %v1314
    %v1316 = vpop.f32.mrb[0].mxu0
    %1317 = vmatprep.mubr.f32.mxu0 0.0
    %1318 = vmatmul.mubr.f32.gmra.mrb[0].mxu0 %v1104
    %v1319 = vpop.f32.mrb[0].mxu0
    %v1320 = vadd.f32 %v1000, %v1319
    %v1321 = vpop.f32.mrb[0].mxu0
    %1322 = vmatprep.mubr.f32.mxu0 0.0
    %1323 = vmatmul.mubr.f32.gmra.mrb[0].mxu0 %v1107
    %v1324 = vpop.f32.mrb[0].mxu0
    %v1325 = vadd.f32 %v1005, %v1324
    %v1326 = vpop.f32.mrb[0].mxu0
    %1327 = vmatprep.mubr.f32.mxu0 0.0
    %1328 = vmatmul.mubr.f32.gmra.mrb[0].mxu0 %v1110
    %v1329 = vpop.f32.mrb[0].mxu0
    %v1330 = vadd.f32 %v1010, %v1329
    %v1331 = vpop.f32.mrb[0].mxu0
    %1332 = vmatprep.mubr.f32.mxu0 0.0
    %1333 = vmatmul.mubr.f32.gmra.mrb[0].mxu0 %v1113
    %v1334 = vpop.f32.mrb[0].mxu0
    %v1335 = vadd.f32 %v1015, %v1334
    %v1336 = vpop.f32.mrb[0].mxu0
    %1337 = vmatprep.mubr.f32.mxu0 0.0
    %1338 = vmatmul.mubr.f32.gmra.mrb[0].mxu0 %v1116
    %v1339 = vpop.f32.mrb[0].mxu0
    %v1340 = vadd.f32 %v1020, %v1339
    %v1341 = vpop.f32.mrb[0].mxu0
    %1342 = vdwg.mxu0
    %v1343 = vmul.f32 %v672, %v1185
    %v1344 = vmul.f32 %v677, %v1190
    %v1345 = vmul.f32 %v682, %v1195
    %v1346 = vmul.f32 %v687, %v1200
    %v1347 = vmul.f32 %v692, %v1205
    %v1348 = vmul.f32 %v697, %v1210
    %v1349 = vmul.f32 %v702, %v1215
    %v1350 = vmul.f32 %v707, %v1220
    %v1351 = vmul.f32 %v712, %v1225
    %v1352 = vmul.f32 %v717, %v1230
    %v1353 = vmul.f32 %v722, %v1235
    %v1354 = vmul.f32 %v727, %v1240
    %v1355 = vmul.f32 %v732, %v1245
    %v1356 = vmul.f32 %v737, %v1250
    %v1357 = vmul.f32 %v742, %v1255
    %v1358 = vmul.f32 %v747, %v1260
    %v1359 = vmul.f32 %v752, %v1265
    %v1360 = vmul.f32 %v757, %v1270
    %v1361 = vmul.f32 %v762, %v1275
    %v1362 = vmul.f32 %v767, %v1280
    %v1363 = vmul.f32 %v772, %v1285
    %v1364 = vmul.f32 %v777, %v1290
    %v1365 = vmul.f32 %v782, %v1295
    %v1366 = vmul.f32 %v787, %v1300
    %v1367 = vmul.f32 %v792, %v1305
    %v1368 = vmul.f32 %v797, %v1310
    %v1369 = vmul.f32 %v802, %v1315
    %v1370 = vmul.f32 %v807, %v1320
    %v1371 = vmul.f32 %v812, %v1325
    %v1372 = vmul.f32 %v817, %v1330
    %v1373 = vmul.f32 %v822, %v1335
    %v1374 = vmul.f32 %v827, %v1340
    %v1375 = vld [vmem:[%s7] sm:$0xff]
    %v1376 = vld [vmem:[%s7 + $0x8] sm:$0xff]
    %1377 = vmatprep.subr.mxu0 0.0
    %1378 = vmatpush1.msra.mxu0 %v1343
    %1379 = vmatprep.subr.mxu0 0.0
    %1380 = vmatpush1.msra.mxu0 %v1344
    %1381 = vmatprep.subr.mxu0 0.0
    %1382 = vmatpush1.msra.mxu0 %v1345
    %1383 = vmatprep.subr.mxu0 0.0
    %1384 = vmatpush1.msra.mxu0 %v1346
    %1385 = vmatprep.subr.mxu0 0.0
    %1386 = vmatpush1.msra.mxu0 %v1347
    %1387 = vmatprep.subr.mxu0 0.0
    %1388 = vmatpush1.msra.mxu0 %v1348
    %1389 = vmatprep.subr.mxu0 0.0
    %1390 = vmatpush1.msra.mxu0 %v1349
    %1391 = vmatprep.subr.mxu0 0.0
    %1392 = vmatpush1.msra.mxu0 %v1350
    %1393 = vmatprep.subr.mxu0 0.0
    %1394 = vmatpush1.msra.mxu0 %v1351
    %1395 = vmatprep.subr.mxu0 0.0
    %1396 = vmatpush1.msra.mxu0 %v1352
    %1397 = vmatprep.subr.mxu0 0.0
    %1398 = vmatpush1.msra.mxu0 %v1353
    %1399 = vmatprep.subr.mxu0 0.0
    %1400 = vmatpush1.msra.mxu0 %v1354
    %1401 = vmatprep.subr.mxu0 0.0
    %1402 = vmatpush1.msra.mxu0 %v1355
    %1403 = vmatprep.subr.mxu0 0.0
    %1404 = vmatpush1.msra.mxu0 %v1356
    %1405 = vmatprep.subr.mxu0 0.0
    %1406 = vmatpush1.msra.mxu0 %v1357
    %1407 = vmatprep.subr.mxu0 0.0
    %1408 = vmatpush1.msra.mxu0 %v1358
    %1409 = vmatprep.subr.mxu0 0.0
    %1410 = vmatpush1.msra.mxu0 %v1359
    %1411 = vmatprep.subr.mxu0 0.0
    %1412 = vmatpush1.msra.mxu0 %v1360
    %1413 = vmatprep.subr.mxu0 0.0
    %1414 = vmatpush1.msra.mxu0 %v1361
    %1415 = vmatprep.subr.mxu0 0.0
    %1416 = vmatpush1.msra.mxu0 %v1362
    %1417 = vmatprep.subr.mxu0 0.0
    %1418 = vmatpush1.msra.mxu0 %v1363
    %1419 = vmatprep.subr.mxu0 0.0
    %1420 = vmatpush1.msra.mxu0 %v1364
    %1421 = vmatprep.subr.mxu0 0.0
    %1422 = vmatpush1.msra.mxu0 %v1365
    %1423 = vmatprep.subr.mxu0 0.0
    %1424 = vmatpush1.msra.mxu0 %v1366
    %1425 = vmatprep.subr.mxu0 0.0
    %1426 = vmatpush1.msra.mxu0 %v1367
    %1427 = vmatprep.subr.mxu0 0.0
    %1428 = vmatpush1.msra.mxu0 %v1368
    %1429 = vmatprep.subr.mxu0 0.0
    %1430 = vmatpush1.msra.mxu0 %v1369
    %1431 = vmatprep.subr.mxu0 0.0
    %1432 = vmatpush1.msra.mxu0 %v1370
    %1433 = vmatprep.subr.mxu0 0.0
    %1434 = vmatpush1.msra.mxu0 %v1371
    %1435 = vmatprep.subr.mxu0 0.0
    %1436 = vmatpush1.msra.mxu0 %v1372
    %1437 = vmatprep.subr.mxu0 0.0
    %1438 = vmatpush1.msra.mxu0 %v1373
    %1439 = vmatprep.subr.mxu0 0.0
    %1440 = vmatpush1.msra.mxu0 %v1374
    %1441 = vmatprep.mubr.f32.mxu0 %v1376
    %1442 = vmatmul.mubr.f32.gmra.mrb[0].mxu0 %v1375
    %v1443 = vpop.f32.mrb[0].mxu0
    %v1444 = vadd.f32 0.0, %v1443
    %v1445 = vpop.f32.mrb[0].mxu0
    %1446 = vdwg.mxu0
    %v1447 = vtanh.pop %v1444
    %v1448 = vld [vmem:[%s8] sm:$0xff]
    %1450 = vset.pattern.permute.xlu0 0
    %1451 = vperm.xlu0 %1450, %v1448
    %v1452 = vpop.permute.xlu0 %1451
    %v1454 = vmul.f32 %v1447, %v1452
    %v1455 = vrot.slane %v1454, 4
    %v1456 = vadd.f32 %v1454, %v1455
    %v1457 = vrot.slane %v1456, 2
    %v1458 = vadd.f32 %v1456, %v1457
    %v1459 = vrot.slane %v1458, 1
    %v1460 = vadd.f32 %v1458, %v1459
    %1461 = vst [vmem:[#allocation2] sm:$0x1] %v1460
    // Predicated region
    $region38: #{tpu_custom_call.1} parent=1 // pred_check
      _
    $region39: #{tpu_custom_call.1} parent=1 // pred_check_branch
      %1463 = sbr.rel (0) target = $region41
    $region40: #{tpu_custom_call.1} parent=1 // pred_region
      %s1465 = ssub.s32 16, 16
      %1466 = vsyncadd [#allocation3], %s1465
      %s1468 = sshll.u32 [#allocation2], 4
      %s1469 = int_to_ptr.vmem [resolvable:$true] %s1468
      %1471 = dma.vmem_to_hbm [thread:$0]  %s1469, 16, %s9, [#allocation3]
    $region41: #{tpu_custom_call.1} parent=1 // pred_fallthru
      _
    // Predicated region
    $region42: #{tpu_custom_call.1} parent=1 // pred_check
      _
    $region43: #{tpu_custom_call.1} parent=1 // pred_check_branch
      %1473 = sbr.rel (0) target = $region45
    $region44: #{tpu_custom_call.1} parent=1 // pred_region
      %1474 = dma.done [#allocation3], 16
    $region45: #{tpu_custom_call.1} parent=1 // pred_fallthru
      _
    %1475 = vsyncpa [#allocation3], 1

</llo_original>
